<compile_context>
chip_gen: v5e
topology: v5e:2x2
jax: 0.10.0
libtpu: 0.0.40
codegen_flags: <defaults>
</compile_context>

<pallas_src>
import jax
import jax.numpy as jnp
from jax.experimental import pallas as pl
from jax.experimental.pallas import tpu as pltpu

_LANE = 128
_TARGET_BLOCK_BYTES = 4 * 1024 * 1024  # ~4 MiB per buffer; x + out double-buffered
                                       # => ~16 MiB pipelined VMEM, under the
                                       # 32 MiB scoped limit on all generations.
_MAX_COL_TILE_LANES = 512 * _LANE      # cap per-row lane extent of a block


def _sublane_for_dtype(dtype) -> int:
    # Native second-minor tile: 8 for 32-bit, 16 for 16-bit, 32 for 8-bit dtypes.
    itemsize = jnp.dtype(dtype).itemsize
    return max(8, 32 // max(1, itemsize))


def _normalize_kernel(sb_ref, x_ref, o_ref):
    # sb_ref: (R, 2) per-row table, col 0 = scale = 1/sd, col 1 = bias = -mean/sd.
    sb = sb_ref[...]
    scale = sb[:, 0:1]   # (R, 1), broadcast across the lane-dense axis
    bias = sb[:, 1:2]    # (R, 1)
    o_ref[...] = (x_ref[...] * scale + bias).astype(o_ref.dtype)


def normalize_layer(x: jax.Array, means: jax.Array, sds: jax.Array) -> jax.Array:
    """Pallas TPU implementation of NormalizeLayer.forward.

    x:     (B, C, H, W) NCHW
    means: (C,) channel means
    sds:   (C,) channel standard deviations
    """
    B, C, H, W = x.shape
    rows = B * C
    cols = H * W
    itemsize = jnp.dtype(x.dtype).itemsize
    sublane = _sublane_for_dtype(x.dtype)

    # Free metadata reshape for contiguous NCHW: (b, c) becomes the row axis,
    # spatial axes become the lane-dense column axis.
    x2 = x.reshape(rows, cols)

    # Fused per-row scale/bias table: out = x * (1/sd) + (-mean/sd).
    scale_c = (1.0 / sds).astype(jnp.float32)
    bias_c = (-means / sds).astype(jnp.float32)
    table = jnp.stack(
        [jnp.tile(scale_c, B), jnp.tile(bias_c, B)], axis=-1
    ).astype(x.dtype)                                        # (rows, 2)

    # ---- tile-size selection -------------------------------------------------
    # Column tile: multiple of 128 lanes, or the full trailing extent.
    if cols % _LANE == 0:
        col_tile = min(cols, _MAX_COL_TILE_LANES)
    else:
        # TODO(synk): for odd spatial sizes (H*W % 128 != 0) regroup multiple
        # rows into one lane-dense slab; for now accept masked-store fallback.
        col_tile = cols

    # Row tile: target ~_TARGET_BLOCK_BYTES per block, rounded to a multiple of
    # the dtype-native sublane count (or the full extent).
    row_tile = max(1, _TARGET_BLOCK_BYTES // (col_tile * itemsize))
    if row_tile >= rows:
        row_tile = rows
    else:
        row_tile = (max(row_tile, sublane) // sublane) * sublane
        row_tile = min(row_tile, rows)

    grid_rows = pl.cdiv(rows, row_tile)
    grid_cols = pl.cdiv(cols, col_tile)

    # v7x has 2 TensorCores: guarantee >= 2 grid steps along a "parallel" axis
    # when the whole problem would otherwise fit in a single block.
    if grid_rows * grid_cols == 1:
        if rows >= 2 * sublane:
            row_tile = (rows // 2 // sublane) * sublane
        elif cols % _LANE == 0 and cols >= 2 * _LANE:
            col_tile = (cols // 2 // _LANE) * _LANE
        grid_rows = pl.cdiv(rows, row_tile)
        grid_cols = pl.cdiv(cols, col_tile)

    grid = (grid_rows, grid_cols)

    n_elem = rows * cols
    cost = pl.CostEstimate(
        flops=2 * n_elem,                                  # one mul + one add per element
        transcendentals=0,
        bytes_accessed=2 * n_elem * itemsize + rows * 2 * itemsize,
    )

    out2 = pl.pallas_call(
        _normalize_kernel,
        out_shape=jax.ShapeDtypeStruct((rows, cols), x.dtype),
        grid=grid,
        in_specs=[
            pl.BlockSpec((row_tile, 2), lambda i, j: (i, 0)),          # scale/bias table
            pl.BlockSpec((row_tile, col_tile), lambda i, j: (i, j)),   # x
        ],
        out_specs=pl.BlockSpec((row_tile, col_tile), lambda i, j: (i, j)),
        compiler_params=pltpu.CompilerParams(
            dimension_semantics=("parallel", "parallel"),
            vmem_limit_bytes=32 * 1024 * 1024,
        ),
        cost_estimate=cost,
    )(table, x2)

    return out2.reshape(B, C, H, W)


if __name__ == "__main__":
    key = jax.random.PRNGKey(0)

    B, C, H, W = 2, 4, 16, 16
    x = jax.random.normal(key, (B, C, H, W), dtype=jnp.float32)

    # Deterministic per-channel means / stds (as __init__ would receive).
    means = jnp.array([0.485, 0.456, 0.406, 0.5], dtype=jnp.float32)
    sds = jnp.array([0.229, 0.224, 0.225, 0.25], dtype=jnp.float32)

    out = normalize_layer(x, means, sds)
    out = jax.block_until_ready(out)

    # Reference check (plain JAX, same semantics as the PyTorch module: true division).
    ref = (x - means[None, :, None, None]) / sds[None, :, None, None]
    assert out.shape == x.shape and out.dtype == x.dtype
    # Tolerance slightly relaxed: kernel uses fused x*(1/sd) + (-mean/sd)
    # instead of a per-element subtract+divide (last-ulp differences only).
    assert jnp.allclose(out, ref, atol=1e-5, rtol=1e-5)

    print("KERNEL_OK")
</pallas_src>

<mosaic_0001>
module attributes {stable_mosaic.version = 11 : i64} {
  func.func @_normalize_kernel(%arg0: i32, %arg1: i32, %arg2: memref<8x2xf32, #tpu.memory_space<vmem>>, %arg3: memref<8x128xf32, #tpu.memory_space<vmem>>, %arg4: memref<8x128xf32, #tpu.memory_space<vmem>>) attributes {dimension_semantics = [#tpu.dimension_semantics<parallel>, #tpu.dimension_semantics<parallel>], iteration_bounds = array<i64: 1, 2>, scalar_prefetch = 0 : i64, scratch_operands = 0 : i64, tpu.core_type = #tpu.core_type<tc>, window_params = [{transform_indices = @transform_0, window_bounds = array<i64: 8, 2>}, {transform_indices = @transform_1, window_bounds = array<i64: 8, 128>}, {transform_indices = @transform_2, window_bounds = array<i64: 8, 128>}]} {
    %c0 = arith.constant 0 : index
    %c0_0 = arith.constant 0 : index
    %0 = vector.load %arg2[%c0, %c0_0] : memref<8x2xf32, #tpu.memory_space<vmem>>, vector<8x2xf32>
    %1 = vector.extract_strided_slice %0 {offsets = [0, 0], sizes = [8, 1], strides = [1, 1]} : vector<8x2xf32> to vector<8x1xf32>
    %2 = vector.extract_strided_slice %0 {offsets = [0, 1], sizes = [8, 1], strides = [1, 1]} : vector<8x2xf32> to vector<8x1xf32>
    %c0_1 = arith.constant 0 : index
    %c0_2 = arith.constant 0 : index
    %3 = vector.load %arg3[%c0_1, %c0_2] : memref<8x128xf32, #tpu.memory_space<vmem>>, vector<8x128xf32>
    %4 = vector.broadcast %1 : vector<8x1xf32> to vector<8x128xf32>
    %5 = arith.mulf %3, %4 : vector<8x128xf32>
    %6 = vector.broadcast %2 : vector<8x1xf32> to vector<8x128xf32>
    %7 = arith.addf %5, %6 : vector<8x128xf32>
    %c0_3 = arith.constant 0 : index
    %c0_4 = arith.constant 0 : index
    %8 = vector.load %arg4[%c0_3, %c0_4] : memref<8x128xf32, #tpu.memory_space<vmem>>, vector<8x128xf32>
    tpu.vector_store %arg4[%c0_3, %c0_4], %7 {strides = array<i32>} : memref<8x128xf32, #tpu.memory_space<vmem>>, vector<8x128xf32>,
    return
  }
  func.func @transform_0(%arg0: i32, %arg1: i32) -> (i32, i32) {
    %c0_i32 = arith.constant 0 : i32
    %c0_i32_0 = arith.constant 0 : i32
    return %arg0, %c0_i32 : i32, i32
  }
  func.func @transform_1(%arg0: i32, %arg1: i32) -> (i32, i32) {
    %c0_i32 = arith.constant 0 : i32
    return %arg0, %arg1 : i32, i32
  }
  func.func @transform_2(%arg0: i32, %arg1: i32) -> (i32, i32) {
    %c0_i32 = arith.constant 0 : i32
    return %arg0, %arg1 : i32, i32
  }
}

</mosaic_0001>

<llo_original>
// kernel: tpu_custom_call.1
$region0: #{tpu_custom_call.1}
  #allocation0 [shape = 'u32[]', space=smem, size = 0x4, offset = 0x4, fixed_abs, tag = 'smem constant byte address 0x4 - core index']
  #allocation1 [shape = 'u32[72,128]{1,0:T(1,128)}', space=vmem, size = 0x9000, scoped, tag = 'internal scratch']
  %s0 = inlined_call_operand.vmem [shape: f32[8,2], index: 0, kind: input, shape index: {}]
  %s1 = inlined_call_operand.hbm [shape: f32[8,256], index: 1, kind: input, shape index: {}]
  %s2 = inlined_call_operand.hbm [shape: f32[8,256], index: 2, kind: output, shape index: {}]
  %s3 = sld [smem:[#allocation0]]
  $region45: #{tpu_custom_call.1} parent=0
    _
  %s5 = ssub.s32 1, %s3
  %s6 = scalar_select 0, %s5, %s3
  $region1: #{tpu_custom_call.1} parent=0
    #allocation2 [shape = 'u8[8192]{0}', space=vmem, size = 0x2000, scoped, tag = 'input window, operand 1']
    #allocation3 [shape = 's32[2]{0}', space=sflag, size = 0x8, scoped, tag = 'scoped memory for tpu_custom_call.1']
    #allocation4 [shape = 's32[2]{0}', space=sflag, size = 0x8, scoped, tag = 'scoped memory for tpu_custom_call.1']
    #allocation5 [shape = 'u8[8192]{0}', space=vmem, size = 0x2000, scoped, tag = 'output window, operand 0']
    %7 = vsyncpa [#allocation3], 0
    %s8 = scalar_lea.sflag [#allocation3], 1
    %9 = vsyncpa %s8, 0
    %10 = vsyncpa [#allocation4], 0
    %s11 = scalar_lea.sflag [#allocation4], 1
    %12 = vsyncpa %s11, 0
    loop: start=0, step=1, limit=4
    $region2: #{tpu_custom_call.1} parent=1 // loop_pre_header
      _
    $region3: #{tpu_custom_call.1} parent=1 // loop_header
      %s14 = sphi 0, %s18
      %p15 = scmp.ge.s32.totalorder %s14, 4
      %s21 = sphi 0, %s33
      %s22 = sphi 0, %s29
      %s23 = sphi 0, %s21
      %s24 = sphi 0, %s22
      %s25 = sphi 0, %s23
      %s26 = sphi 0, %s24
      %s36 = sphi 0, %s38
      %s39 = sphi 0, %s36
      %s40 = sphi 0, %s39
      %s56 = sphi 0, %s40
      %s64 = sphi 0, %s66
      %s67 = sphi 0, %s64
      %s68 = sphi 0, %s67
      %s84 = sphi 0, %s68
      %s92 = sphi 0, %s94
      %s95 = sphi 0, %s92
      %s96 = sphi 0, %s95
      %s112 = sphi 0, %s96
    $region4: #{tpu_custom_call.1} parent=1 // loop_header_branch
      %17 = sbr.rel (%p15) target = $region8
    $region5: #{tpu_custom_call.1} parent=1 // loop_body
      %s19 = ssub.s32 %s14, 1
      %s20 = ssub.s32 %s14, 2
      %s27 = sadd.s32 1, %s22
      %p28 = scmp.ge.s32.totalorder %s27, 2
      %s29 = scalar_select %p28, 0, %s27
      %s30 = sadd.s32 1, %s21
      %s31 = scalar_select %p28, %s30, %s21
      %p32 = scmp.ge.s32.totalorder %s31, 1
      %s33 = scalar_select %p32, 0, %s31
      %s34 = ssub.s32 %s21, %s33
      %p35 = scmp.eq.s32.totalorder %s34, 0
      %s37 = sadd.s32 %s36, 1
      %s38 = scalar_select %p35, %s36, %s37
      %p41 = pneg %p35
      %p42 = scmp.eq.s32.totalorder %s14, 1
      %p43 = por %p41, %p42
      %p44 = scmp.ne.s32.totalorder %s36, %s39
      %p45 = scmp.eq.s32.totalorder %s14, 0
      %p46 = por %p44, %p45
      %p47 = scmp.ne.s32.totalorder %s36, %s39
      %p48 = scmp.eq.s32.totalorder %s19, 1
      %p49 = por %p47, %p48
      %p50 = scmp.ne.s32.totalorder %s39, %s40
      %p51 = scmp.eq.s32.totalorder %s19, 0
      %p52 = por %p50, %p51
      %p53 = scmp.ne.s32.totalorder %s39, %s40
      %p54 = scmp.eq.s32.totalorder %s20, 1
      %p55 = por %p53, %p54
      %p57 = scmp.ne.s32.totalorder %s40, %s56
      %p58 = scmp.eq.s32.totalorder %s20, 0
      %p59 = por %p57, %p58
      %s60 = ssub.s32 %s21, %s33
      %s61 = ssub.s32 %s22, %s29
      %s62 = sor.u32 %s60, %s61
      %p63 = scmp.eq.s32.totalorder %s62, 0
      %s65 = sadd.s32 %s64, 1
      %s66 = scalar_select %p63, %s64, %s65
      %p69 = pneg %p63
      %p70 = scmp.eq.s32.totalorder %s14, 1
      %p71 = por %p69, %p70
      %p72 = scmp.ne.s32.totalorder %s64, %s67
      %p73 = scmp.eq.s32.totalorder %s14, 0
      %p74 = por %p72, %p73
      %p75 = scmp.ne.s32.totalorder %s64, %s67
      %p76 = scmp.eq.s32.totalorder %s19, 1
      %p77 = por %p75, %p76
      %p78 = scmp.ne.s32.totalorder %s67, %s68
      %p79 = scmp.eq.s32.totalorder %s19, 0
      %p80 = por %p78, %p79
      %p81 = scmp.ne.s32.totalorder %s67, %s68
      %p82 = scmp.eq.s32.totalorder %s20, 1
      %p83 = por %p81, %p82
      %p85 = scmp.ne.s32.totalorder %s68, %s84
      %p86 = scmp.eq.s32.totalorder %s20, 0
      %p87 = por %p85, %p86
      %s88 = ssub.s32 %s21, %s33
      %s89 = ssub.s32 %s22, %s29
      %s90 = sor.u32 %s88, %s89
      %p91 = scmp.eq.s32.totalorder %s90, 0
      %s93 = sadd.s32 %s92, 1
      %s94 = scalar_select %p91, %s92, %s93
      %p97 = pneg %p91
      %p98 = scmp.eq.s32.totalorder %s14, 1
      %p99 = por %p97, %p98
      %p100 = scmp.ne.s32.totalorder %s92, %s95
      %p101 = scmp.eq.s32.totalorder %s14, 0
      %p102 = por %p100, %p101
      %p103 = scmp.ne.s32.totalorder %s92, %s95
      %p104 = scmp.eq.s32.totalorder %s19, 1
      %p105 = por %p103, %p104
      %p106 = scmp.ne.s32.totalorder %s95, %s96
      %p107 = scmp.eq.s32.totalorder %s19, 0
      %p108 = por %p106, %p107
      %p109 = scmp.ne.s32.totalorder %s95, %s96
      %p110 = scmp.eq.s32.totalorder %s20, 1
      %p111 = por %p109, %p110
      %p113 = scmp.ne.s32.totalorder %s96, %s112
      %p114 = scmp.eq.s32.totalorder %s20, 0
      %p115 = por %p113, %p114
      %p116 = scmp.le.s32.totalorder 1, %s14
      %p117 = scmp.lt.s32.totalorder %s14, 3
      %p118 = pnand %p116, %p117
      %p119 = pneg %p118
      // Predicated region
      $region9: #{tpu_custom_call.1} parent=5 // pred_check
        _
      $region10: #{tpu_custom_call.1} parent=5 // pred_check_branch
        %121 = sbr.rel (%p118) target = $region12
      $region11: #{tpu_custom_call.1} parent=5 // pred_region
        %s122 = ssub.s32 %s14, 1
        // Predicated region
        $region13: #{tpu_custom_call.1} parent=11 // pred_check
          %p123 = pneg %p52
        $region14: #{tpu_custom_call.1} parent=11 // pred_check_branch
          %125 = sbr.rel (%p123) target = $region16
        $region15: #{tpu_custom_call.1} parent=11 // pred_region
          %p126 = scmp.lt.s32.totalorder %s23, 0
          %s127 = scalar_select %p126, %s23, 0
          %s128 = smul.addr %s127, 8
          %s129 = scalar_lea.vmem %s0, %s128
        $region16: #{tpu_custom_call.1} parent=11 // pred_fallthru
          _
      $region12: #{tpu_custom_call.1} parent=5 // pred_fallthru
        _
      %p130 = scmp.lt.s32.totalorder %s14, 2
      // Predicated region
      $region17: #{tpu_custom_call.1} parent=5 // pred_check
        %p131 = pneg %p130
      $region18: #{tpu_custom_call.1} parent=5 // pred_check_branch
        %133 = sbr.rel (%p131) target = $region20
      $region19: #{tpu_custom_call.1} parent=5 // pred_region
        // Predicated region
        $region21: #{tpu_custom_call.1} parent=19 // pred_check
          %p134 = pneg %p74
        $region22: #{tpu_custom_call.1} parent=19 // pred_check_branch
          %136 = sbr.rel (%p134) target = $region24
        $region23: #{tpu_custom_call.1} parent=19 // pred_region
          %s137 = sand.u32 %s64, 1
          %s138 = scalar_lea.sflag [#allocation3], %s137
          %s139 = sand.u32 %s64, 1
          %s140 = smul.addr %s139, 8
          %s141 = scalar_lea.vmem [#allocation2], %s140
          %143 = vsyncadd %s138, 0
          %s144 = smul.addr %s21, 2
          %s145 = sadd.s32 %s22, %s144
          %s146 = smul.addr %s145, 8
          %s147 = scalar_lea.hbm %s1, %s146
          %s149 = sshll.u32 %s147, 4
          %s150 = int_to_ptr.hbm [resolvable:$true] %s149
          %s151 = sshll.u32 %s141, 4
          %s152 = int_to_ptr.vmem [resolvable:$true] %s151
          %154 = dma.hbm_to_vmem [thread:$0]  %s150, 128, %s152, %s138
        $region24: #{tpu_custom_call.1} parent=19 // pred_fallthru
          _
      $region20: #{tpu_custom_call.1} parent=5 // pred_fallthru
        _
      %p155 = scmp.le.s32.totalorder 1, %s14
      %p156 = scmp.lt.s32.totalorder %s14, 3
      %p157 = pnand %p155, %p156
      %p158 = pneg %p157
      // Predicated region
      $region25: #{tpu_custom_call.1} parent=5 // pred_check
        _
      $region26: #{tpu_custom_call.1} parent=5 // pred_check_branch
        %160 = sbr.rel (%p157) target = $region28
      $region27: #{tpu_custom_call.1} parent=5 // pred_region
        %s161 = ssub.s32 %s14, 1
        %s162 = sand.u32 %s67, 1
        %s163 = scalar_lea.sflag [#allocation3], %s162
        %s164 = sand.u32 %s67, 1
        %s165 = smul.addr %s164, 8
        %s166 = scalar_lea.vmem [#allocation2], %s165
        // Predicated region
        $region29: #{tpu_custom_call.1} parent=27 // pred_check
          %p167 = pneg %p80
        $region30: #{tpu_custom_call.1} parent=27 // pred_check_branch
          %169 = sbr.rel (%p167) target = $region32
        $region31: #{tpu_custom_call.1} parent=27 // pred_region
          %171 = dma.done %s163, 128
        $region32: #{tpu_custom_call.1} parent=27 // pred_fallthru
          _
        %p172 = scmp.lt.s32.totalorder %s23, 0
        %s173 = scalar_select %p172, %s23, 0
        %s174 = smul.addr %s173, 8
        %s175 = scalar_lea.vmem %s0, %s174
        %p176 = pneg %p52
        %p177 = pneg %p49
        %s178 = sand.u32 %s67, 1
        %s179 = scalar_lea.sflag [#allocation3], %s178
        %s180 = sand.u32 %s67, 1
        %s181 = smul.addr %s180, 8
        %s182 = scalar_lea.vmem [#allocation2], %s181
        %p183 = pneg %p80
        %p184 = pneg %p77
        %p185 = pneg %p108
        %p186 = pneg %p105
        %s187 = sand.u32 %s95, 1
        %s188 = scalar_lea.sflag [#allocation4], %s187
        %s189 = sand.u32 %s95, 1
        %s190 = smul.addr %s189, 8
        %s191 = scalar_lea.vmem [#allocation5], %s190
        %p192 = scmp.lt.s32.totalorder %s23, 0
        %s193 = scalar_select %p192, %s23, 0
        %s194 = smul.addr %s193, 8
        %s195 = scalar_lea.vmem %s0, %s194
        %v196 = vld [vmem:[%s195] sm:$0xff]
        %v197 = vld [vmem:[%s166] sm:$0xff]
        %199 = vset.pattern.permute.xlu0 0
        %200 = vperm.xlu0 %199, %v196
        %v201 = vpop.permute.xlu0 %200
        %v203 = vmul.f32 %v197, %v201
        %204 = vset.pattern.permute.xlu0 1
        %205 = vperm.xlu0 %204, %v196
        %v206 = vpop.permute.xlu0 %205
        %v208 = vadd.f32 %v203, %v206
        %209 = vst [vmem:[%s191] sm:$0xff] %v208
        %s210 = sand.u32 %s95, 1
        %s211 = scalar_lea.sflag [#allocation4], %s210
        %s212 = sand.u32 %s95, 1
        %s213 = smul.addr %s212, 8
        %s214 = scalar_lea.vmem [#allocation5], %s213
        // Predicated region
        $region33: #{tpu_custom_call.1} parent=27 // pred_check
          %p215 = pneg %p105
        $region34: #{tpu_custom_call.1} parent=27 // pred_check_branch
          %217 = sbr.rel (%p215) target = $region36
        $region35: #{tpu_custom_call.1} parent=27 // pred_region
          %219 = vsyncadd %s211, 0
          %s220 = smul.addr %s23, 2
          %s221 = sadd.s32 %s24, %s220
          %s222 = smul.addr %s221, 8
          %s223 = scalar_lea.hbm %s2, %s222
          %s225 = sshll.u32 %s214, 4
          %s226 = int_to_ptr.vmem [resolvable:$true] %s225
          %s227 = sshll.u32 %s223, 4
          %s228 = int_to_ptr.hbm [resolvable:$true] %s227
          %230 = dma.vmem_to_hbm [thread:$0]  %s226, 128, %s228, %s211
        $region36: #{tpu_custom_call.1} parent=27 // pred_fallthru
          _
      $region28: #{tpu_custom_call.1} parent=5 // pred_fallthru
        _
      %p231 = scmp.le.s32.totalorder 2, %s14
      // Predicated region
      $region37: #{tpu_custom_call.1} parent=5 // pred_check
        %p232 = pneg %p231
      $region38: #{tpu_custom_call.1} parent=5 // pred_check_branch
        %234 = sbr.rel (%p232) target = $region40
      $region39: #{tpu_custom_call.1} parent=5 // pred_region
        %s235 = ssub.s32 %s14, 2
        // Predicated region
        $region41: #{tpu_custom_call.1} parent=39 // pred_check
          %p236 = pneg %p111
        $region42: #{tpu_custom_call.1} parent=39 // pred_check_branch
          %238 = sbr.rel (%p236) target = $region44
        $region43: #{tpu_custom_call.1} parent=39 // pred_region
          %s239 = sand.u32 %s96, 1
          %s240 = scalar_lea.sflag [#allocation4], %s239
          %s241 = sand.u32 %s96, 1
          %s242 = smul.addr %s241, 8
          %s243 = scalar_lea.vmem [#allocation5], %s242
          %245 = dma.done %s240, 128
        $region44: #{tpu_custom_call.1} parent=39 // pred_fallthru
          _
      $region40: #{tpu_custom_call.1} parent=5 // pred_fallthru
        _
    $region6: #{tpu_custom_call.1} parent=1 // loop_footer
      %s18 = sadd.s32 1, %s14
    $region7: #{tpu_custom_call.1} parent=1 // loop_footer_branch
      %13 = sbr.rel target = $region3
    $region8: #{tpu_custom_call.1} parent=1 // loop_exit
      _
    %246 = vsyncpa [#allocation3], 1
    %s247 = scalar_lea.sflag [#allocation3], 1
    %248 = vsyncpa %s247, 1
    %249 = vsyncpa [#allocation4], 1
    %s250 = scalar_lea.sflag [#allocation4], 1
    %251 = vsyncpa %s250, 1

</llo_original>
